<compile_context>
chip_gen: v5e
topology: v5e:2x2
jax: 0.10.0
libtpu: 0.0.40
codegen_flags: <defaults>
</compile_context>

<pallas_src>
import functools

import jax
import jax.numpy as jnp
from jax.experimental import pallas as pl
from jax.experimental.pallas import tpu as pltpu


def _vq_kernel(x_ref, e_ref, et_ref, he2_ref, q_ref, idx_ref, sse_ref, *,
               s_valid, use_bf16_dist):
    """One (batch, spatial-tile) grid step of the VQ forward pass.

    x_ref  : (D, TS) f32  input columns (channel-major, spatial in lanes)
    e_ref  : (K, D)  f32  codebook (resident across the grid)
    et_ref : (D, K)  f32  codebook transpose (resident)
    he2_ref: (K, 1)  f32  precomputed 0.5 * ||e_k||^2 (resident)
    q_ref  : (D, TS) f32  quantized columns                       (out)
    idx_ref: (1, TS) i32  nearest-code indices                    (out)
    sse_ref: (1, 1)  f32  per-tile partial sum of squared error   (out)
    """
    x = x_ref[...]                          # (D, TS)
    e = e_ref[...]                          # (K, D)
    k = e.shape[0]
    ts = x.shape[1]

    # argmin_k ||x - e_k||^2 == argmin_k (0.5*||e_k||^2 - e_k . x); the per-
    # column ||x||^2 term is constant w.r.t. k and the 2x is pre-folded.
    if use_bf16_dist:
        cross = jnp.dot(e.astype(jnp.bfloat16), x.astype(jnp.bfloat16),
                        preferred_element_type=jnp.float32)        # (K, TS)
    else:
        cross = jnp.dot(e, x, preferred_element_type=jnp.float32)  # (K, TS) MXU
    dist = he2_ref[...] - cross                                    # (K, TS)

    # First-occurrence argmin over the code axis (matches torch.argmin).
    iota_k = jax.lax.broadcasted_iota(jnp.int32, (k, ts), 0)
    dmin = jnp.min(dist, axis=0, keepdims=True)                    # (1, TS)
    idx = jnp.min(jnp.where(dist == dmin, iota_k, jnp.int32(k)),
                  axis=0, keepdims=True)                           # (1, TS)

    # One-hot stays a VMEM temporary; quantized columns via MXU.
    enc = (iota_k == idx).astype(jnp.float32)                      # (K, TS)
    q = jnp.dot(et_ref[...], enc, preferred_element_type=jnp.float32)  # (D, TS)

    q_ref[...] = q                                                 # lane-dense
    idx_ref[...] = idx                                             # lane-dense

    # Per-tile partial SSE; mask out-of-range columns of a trailing partial
    # tile (static condition — no cost when S divides evenly).
    diff = q - x
    if s_valid % ts != 0:
        col = (pl.program_id(1) * ts
               + jax.lax.broadcasted_iota(jnp.int32, (1, ts), 1))
        diff = jnp.where(col < s_valid, diff, 0.0)
    sse_ref[...] = jnp.sum(diff * diff, axis=(0, 1), keepdims=True)


def vector_quantizer(x_nchw, embedding, commitment_cost, *,
                     vmem_budget_bytes=24 * 1024 * 1024,
                     use_bf16_dist=False):
    """Forward pass of VectorQuantizer.

    Args:
      x_nchw:    (B, C, H, W) float32, C == embedding_dim.
      embedding: (K, D) float32 codebook.
    Returns:
      (loss_scalar, quantized (B, C, H, W), encodings (B*H*W, K))
    """
    B, C, H, W = x_nchw.shape
    K, D = embedding.shape
    assert C == D, "channel dim must equal embedding_dim"
    S = H * W

    # Free reshape (no transpose): channel-major (B, D, S).
    x = x_nchw.reshape(B, D, S).astype(jnp.float32)

    emb = embedding.astype(jnp.float32)
    e_t = emb.T                                         # (D, K), tiny
    half_e2 = (0.5 * jnp.sum(emb * emb, axis=1)).reshape(K, 1)

    # ---- spatial tile size from a conservative VMEM budget ------------------
    # Per spatial column (f32 bytes): double-buffered in/out blocks
    # 2*(x:D + q:D + idx:1)*4, plus ~4 in-kernel (K, TS) temporaries
    # (cross/dist/iota/one-hot) at 4*K*4, plus slack.  The 24 MiB default is
    # sized against v7x's 64 MiB physical VMEM (safe on v5e/v6e too).
    bytes_per_col = 8 * (2 * D + 1) + 16 * K + 256
    ts = max(128, (vmem_budget_bytes // bytes_per_col) // 128 * 128)
    s_ceil = -(-S // 128) * 128
    ts = min(ts, s_ceil)
    # Keep >= 2 total grid steps so both v7x TensorCores get work.
    if B * pl.cdiv(S, ts) < 2 and ts >= 256:
        ts = (ts // 2) // 128 * 128
    grid_s = pl.cdiv(S, ts)

    kernel = functools.partial(_vq_kernel, s_valid=S,
                               use_bf16_dist=use_bf16_dist)

    q, idx, sse = pl.pallas_call(
        kernel,
        out_shape=(
            jax.ShapeDtypeStruct((B, D, S), jnp.float32),          # quantized
            jax.ShapeDtypeStruct((B, 1, S), jnp.int32),            # indices
            jax.ShapeDtypeStruct((B, grid_s, 1, 1), jnp.float32),  # SSE partials
        ),
        grid=(B, grid_s),
        in_specs=[
            pl.BlockSpec((None, D, ts), lambda b, s: (b, 0, s)),   # x tile
            pl.BlockSpec((K, D), lambda b, s: (0, 0)),             # codebook
            pl.BlockSpec((D, K), lambda b, s: (0, 0)),             # codebook^T
            pl.BlockSpec((K, 1), lambda b, s: (0, 0)),             # 0.5*||e||^2
        ],
        out_specs=(
            pl.BlockSpec((None, D, ts), lambda b, s: (b, 0, s)),
            pl.BlockSpec((None, 1, ts), lambda b, s: (b, 0, s)),
            pl.BlockSpec((None, None, 1, 1), lambda b, s: (b, s, 0, 0)),
        ),
        compiler_params=pltpu.CompilerParams(
            dimension_semantics=("parallel", "parallel"),
            vmem_limit_bytes=32 * 1024 * 1024),
    )(x, emb, e_t, half_e2)

    # Both MSE terms have identical forward values; loss = (1 + beta) * mse.
    mse = jnp.sum(sse) / jnp.float32(B * S * D)
    loss = (1.0 + commitment_cost) * mse

    quantized = q.reshape(B, D, H, W)                   # already NCHW
    # Row order of encodings is (b, h, w) — identical to the NHWC-flattened
    # order used by the PyTorch module.
    encodings = jax.nn.one_hot(idx.reshape(-1), K, dtype=jnp.float32)
    return loss, quantized, encodings


def _reference(x_nchw, emb, beta):
    """Pure-JAX mirror of the PyTorch forward (for verification only)."""
    B, C, H, W = x_nchw.shape
    x_nhwc = jnp.transpose(x_nchw, (0, 2, 3, 1))
    flat = x_nhwc.reshape(-1, C)
    d = (jnp.sum(flat ** 2, axis=1, keepdims=True)
         + jnp.sum(emb ** 2, axis=1) - 2.0 * flat @ emb.T)
    idx = jnp.argmin(d, axis=1)
    enc = jax.nn.one_hot(idx, emb.shape[0], dtype=jnp.float32)
    q = (enc @ emb).reshape(B, H, W, C)
    mse = jnp.mean((q - x_nhwc) ** 2)
    return (1.0 + beta) * mse, jnp.transpose(q, (0, 3, 1, 2)), enc


if __name__ == "__main__":
    # Module hyper-parameters (deterministic, in-script init).
    num_embeddings = 32          # K
    embedding_dim = 8            # D (== input channels)
    commitment_cost = 0.25

    key = jax.random.PRNGKey(0)
    k_emb, k_x = jax.random.split(key)

    # nn.Embedding weight initialized uniform(-1/K, 1/K), shape (K, D).
    embedding = jax.random.uniform(
        k_emb, (num_embeddings, embedding_dim),
        minval=-1.0 / num_embeddings, maxval=1.0 / num_embeddings,
        dtype=jnp.float32)

    # Input in NCHW, C == embedding_dim.  S = 16*16 = 256 spatial columns.
    x = jax.random.normal(k_x, (2, embedding_dim, 16, 16), dtype=jnp.float32)

    loss, quantized, encodings = jax.jit(
        lambda a, b: vector_quantizer(a, b, commitment_cost))(x, embedding)
    jax.block_until_ready((loss, quantized, encodings))

    assert quantized.shape == x.shape
    assert encodings.shape == (2 * 16 * 16, num_embeddings)
    assert loss.shape == ()
    # Each row must select exactly one code.
    assert bool(jnp.all(jnp.sum(encodings, axis=1) == 1.0))

    # Verify against the pure-JAX reference of the PyTorch forward.
    ref_loss, ref_q, ref_enc = _reference(x, embedding, commitment_cost)
    assert bool(jnp.allclose(loss, ref_loss, rtol=1e-5, atol=1e-6))
    assert bool(jnp.allclose(quantized, ref_q, rtol=1e-5, atol=1e-5))
    assert bool(jnp.allclose(encodings, ref_enc))

    print("KERNEL_OK")
</pallas_src>

<mosaic_0001>
module attributes {stable_mosaic.version = 11 : i64} {
  func.func @_vq_kernel(%arg0: i32, %arg1: i32, %arg2: memref<1x8x256xf32, #tpu.memory_space<vmem>>, %arg3: memref<32x8xf32, #tpu.memory_space<vmem>>, %arg4: memref<8x32xf32, #tpu.memory_space<vmem>>, %arg5: memref<32x1xf32, #tpu.memory_space<vmem>>, %arg6: memref<1x8x256xf32, #tpu.memory_space<vmem>>, %arg7: memref<1x1x256xi32, #tpu.memory_space<vmem>>, %arg8: memref<1x1x1x1xf32, #tpu.memory_space<vmem>>) attributes {dimension_semantics = [#tpu.dimension_semantics<parallel>, #tpu.dimension_semantics<parallel>], iteration_bounds = array<i64: 2, 1>, scalar_prefetch = 0 : i64, scratch_operands = 0 : i64, tpu.core_type = #tpu.core_type<tc>, window_params = [{transform_indices = @transform_0, window_bounds = array<i64: 1, 8, 256>}, {pipeline_mode = #tpu.pipeline_mode<synchronous>, transform_indices = @transform_1, window_bounds = array<i64: 32, 8>}, {pipeline_mode = #tpu.pipeline_mode<synchronous>, transform_indices = @transform_2, window_bounds = array<i64: 8, 32>}, {pipeline_mode = #tpu.pipeline_mode<synchronous>, transform_indices = @transform_3, window_bounds = array<i64: 32, 1>}, {transform_indices = @transform_4, window_bounds = array<i64: 1, 8, 256>}, {transform_indices = @transform_5, window_bounds = array<i64: 1, 1, 256>}, {transform_indices = @transform_6, window_bounds = array<i64: 1, 1, 1, 1>}]} {
    %c0 = arith.constant 0 : index
    %c0_0 = arith.constant 0 : index
    %c0_1 = arith.constant 0 : index
    %0 = vector.load %arg2[%c0, %c0_0, %c0_1] : memref<1x8x256xf32, #tpu.memory_space<vmem>>, vector<1x8x256xf32>
    %1 = vector.shape_cast %0 : vector<1x8x256xf32> to vector<8x256xf32>
    %c0_2 = arith.constant 0 : index
    %c0_3 = arith.constant 0 : index
    %2 = vector.load %arg3[%c0_2, %c0_3] : memref<32x8xf32, #tpu.memory_space<vmem>>, vector<32x8xf32>
    %cst = arith.constant dense<0.000000e+00> : vector<32x256xf32>
    %3 = tpu.matmul %2, %1, %cst {dimension_numbers = #tpu.dot_dimension_numbers<[1], [0], [0], [1], [0, 0, 1, 1], [], []>} : vector<32x8xf32>, vector<8x256xf32>, vector<32x256xf32> -> vector<32x256xf32>
    %c0_4 = arith.constant 0 : index
    %c0_5 = arith.constant 0 : index
    %4 = vector.load %arg5[%c0_4, %c0_5] : memref<32x1xf32, #tpu.memory_space<vmem>>, vector<32x1xf32>
    %5 = vector.broadcast %4 : vector<32x1xf32> to vector<32x256xf32>
    %6 = arith.subf %5, %3 : vector<32x256xf32>
    %7 = tpu.iota {dimensions = array<i32: 0>} : vector<32x256xi32>
    %cst_6 = arith.constant dense<0x7F800000> : vector<256xf32>
    %8 = vector.multi_reduction <minimumf>, %6, %cst_6 [0] : vector<32x256xf32> to vector<256xf32>
    %9 = vector.shape_cast %8 : vector<256xf32> to vector<1x256xf32>
    %10 = vector.broadcast %9 : vector<1x256xf32> to vector<32x256xf32>
    %11 = arith.cmpf oeq, %6, %10 : vector<32x256xf32>
    %c32_i32 = arith.constant 32 : i32
    %12 = vector.broadcast %c32_i32 : i32 to vector<32x256xi32>
    %13 = arith.select %11, %7, %12 : vector<32x256xi1>, vector<32x256xi32>
    %cst_7 = arith.constant dense<2147483647> : vector<256xi32>
    %14 = vector.multi_reduction <minsi>, %13, %cst_7 [0] : vector<32x256xi32> to vector<256xi32>
    %15 = vector.shape_cast %14 : vector<256xi32> to vector<1x256xi32>
    %16 = vector.broadcast %15 : vector<1x256xi32> to vector<32x256xi32>
    %17 = arith.cmpi eq, %7, %16 : vector<32x256xi32>
    %18 = arith.extui %17 : vector<32x256xi1> to vector<32x256xi32>
    %19 = arith.sitofp %18 : vector<32x256xi32> to vector<32x256xf32>
    %c0_8 = arith.constant 0 : index
    %c0_9 = arith.constant 0 : index
    %20 = vector.load %arg4[%c0_8, %c0_9] : memref<8x32xf32, #tpu.memory_space<vmem>>, vector<8x32xf32>
    %cst_10 = arith.constant dense<0.000000e+00> : vector<8x256xf32>
    %21 = tpu.matmul %20, %19, %cst_10 {dimension_numbers = #tpu.dot_dimension_numbers<[1], [0], [0], [1], [0, 0, 1, 1], [], []>} : vector<8x32xf32>, vector<32x256xf32>, vector<8x256xf32> -> vector<8x256xf32>
    %c0_11 = arith.constant 0 : index
    %c0_12 = arith.constant 0 : index
    %c0_13 = arith.constant 0 : index
    %22 = vector.load %arg6[%c0_11, %c0_12, %c0_13] : memref<1x8x256xf32, #tpu.memory_space<vmem>>, vector<1x8x256xf32>
    %23 = vector.shape_cast %22 : vector<1x8x256xf32> to vector<8x256xf32>
    %24 = vector.shape_cast %21 : vector<8x256xf32> to vector<1x8x256xf32>
    tpu.vector_store %arg6[%c0_11, %c0_12, %c0_13], %24 {strides = array<i32>} : memref<1x8x256xf32, #tpu.memory_space<vmem>>, vector<1x8x256xf32>,
    %c0_14 = arith.constant 0 : index
    %c0_15 = arith.constant 0 : index
    %c0_16 = arith.constant 0 : index
    %25 = vector.load %arg7[%c0_14, %c0_15, %c0_16] : memref<1x1x256xi32, #tpu.memory_space<vmem>>, vector<1x1x256xi32>
    %26 = vector.shape_cast %25 : vector<1x1x256xi32> to vector<1x256xi32>
    %27 = vector.shape_cast %15 : vector<1x256xi32> to vector<1x1x256xi32>
    tpu.vector_store %arg7[%c0_14, %c0_15, %c0_16], %27 {strides = array<i32>} : memref<1x1x256xi32, #tpu.memory_space<vmem>>, vector<1x1x256xi32>,
    %28 = arith.subf %21, %1 : vector<8x256xf32>
    %29 = arith.mulf %28, %28 : vector<8x256xf32>
    %30 = vector.shape_cast %29 : vector<8x256xf32> to vector<1x8x256xf32>
    %cst_17 = arith.constant dense<0.000000e+00> : vector<1xf32>
    %31 = vector.multi_reduction <add>, %30, %cst_17 [1, 2] : vector<1x8x256xf32> to vector<1xf32>
    %32 = vector.shape_cast %31 : vector<1xf32> to vector<1x1x1xf32>
    %33 = vector.extract %32[0, 0, 0] : f32 from vector<1x1x1xf32>
    %34 = vector.broadcast %33 : f32 to vector<1x1xf32>
    %c0_18 = arith.constant 0 : index
    %c0_19 = arith.constant 0 : index
    %c0_20 = arith.constant 0 : index
    %c0_21 = arith.constant 0 : index
    %35 = vector.load %arg8[%c0_18, %c0_19, %c0_20, %c0_21] : memref<1x1x1x1xf32, #tpu.memory_space<vmem>>, vector<1x1x1x1xf32>
    %36 = vector.shape_cast %35 : vector<1x1x1x1xf32> to vector<1x1xf32>
    %37 = vector.shape_cast %34 : vector<1x1xf32> to vector<1x1x1x1xf32>
    tpu.vector_store %arg8[%c0_18, %c0_19, %c0_20, %c0_21], %37 {strides = array<i32>} : memref<1x1x1x1xf32, #tpu.memory_space<vmem>>, vector<1x1x1x1xf32>,
    return
  }
  func.func @transform_0(%arg0: i32, %arg1: i32) -> (i32, i32, i32) {
    %c0_i32 = arith.constant 0 : i32
    %c0_i32_0 = arith.constant 0 : i32
    return %arg0, %c0_i32, %arg1 : i32, i32, i32
  }
  func.func @transform_1(%arg0: i32, %arg1: i32) -> (i32, i32) {
    %c0_i32 = arith.constant 0 : i32
    %c0_i32_0 = arith.constant 0 : i32
    %c0_i32_1 = arith.constant 0 : i32
    return %c0_i32, %c0_i32_0 : i32, i32
  }
  func.func @transform_2(%arg0: i32, %arg1: i32) -> (i32, i32) {
    %c0_i32 = arith.constant 0 : i32
    %c0_i32_0 = arith.constant 0 : i32
    %c0_i32_1 = arith.constant 0 : i32
    return %c0_i32, %c0_i32_0 : i32, i32
  }
  func.func @transform_3(%arg0: i32, %arg1: i32) -> (i32, i32) {
    %c0_i32 = arith.constant 0 : i32
    %c0_i32_0 = arith.constant 0 : i32
    %c0_i32_1 = arith.constant 0 : i32
    return %c0_i32, %c0_i32_0 : i32, i32
  }
  func.func @transform_4(%arg0: i32, %arg1: i32) -> (i32, i32, i32) {
    %c0_i32 = arith.constant 0 : i32
    %c0_i32_0 = arith.constant 0 : i32
    return %arg0, %c0_i32, %arg1 : i32, i32, i32
  }
  func.func @transform_5(%arg0: i32, %arg1: i32) -> (i32, i32, i32) {
    %c0_i32 = arith.constant 0 : i32
    %c0_i32_0 = arith.constant 0 : i32
    return %arg0, %c0_i32, %arg1 : i32, i32, i32
  }
  func.func @transform_6(%arg0: i32, %arg1: i32) -> (i32, i32, i32, i32) {
    %c0_i32 = arith.constant 0 : i32
    %c0_i32_0 = arith.constant 0 : i32
    %c0_i32_1 = arith.constant 0 : i32
    return %arg0, %arg1, %c0_i32, %c0_i32_0 : i32, i32, i32, i32
  }
}

</mosaic_0001>

<llo_original>
// kernel: _lambda_.1
$region0: #{_lambda_.1}
  #allocation0 [shape = 'u32[]', space=smem, size = 0x4, offset = 0x4, fixed_abs, tag = 'smem constant byte address 0x4 - core index']
  #allocation1 [shape = 'u32[72,128]{1,0:T(1,128)}', space=vmem, size = 0x9000, scoped, tag = 'internal scratch']
  %s0 = inlined_call_operand.vmem [shape: f32[2,8,256], index: 0, kind: input, shape index: {}]
  %s1 = inlined_call_operand.vmem [shape: f32[32,8], index: 1, kind: input, shape index: {}]
  %s2 = inlined_call_operand.vmem [shape: f32[8,32], index: 2, kind: input, shape index: {}]
  %s3 = inlined_call_operand.vmem [shape: f32[32,1], index: 3, kind: input, shape index: {}]
  %s4 = inlined_call_operand.vmem [shape: f32[2,8,256], index: 4, kind: output, shape index: {0}]
  %s5 = inlined_call_operand.vmem [shape: s32[2,1,256], index: 5, kind: output, shape index: {1}]
  %s6 = inlined_call_operand.vmem [shape: f32[2,1,1,1], index: 6, kind: output, shape index: {2}]
  %7 = xla_tuple %s4, %s5, %s6
  %s8 = sld [smem:[#allocation0]]
  $region65: #{_lambda_.1} parent=0
    _
  %s10 = ssub.s32 1, %s8
  %s11 = scalar_select 0, %s10, %s8
  loop: start=0, step=1, limit=4
  $region2: #{_lambda_.1} parent=0 // loop_pre_header
    _
  $region3: #{_lambda_.1} parent=0 // loop_header
    %s13 = sphi 0, %s17
    %p14 = scmp.ge.s32.totalorder %s13, 4
    %s20 = sphi 0, %s32
    %s21 = sphi 0, %s28
    %s22 = sphi 0, %s20
    %s23 = sphi 0, %s21
    %s24 = sphi 0, %s22
    %s25 = sphi 0, %s23
    %s37 = sphi 0, %s39
    %s40 = sphi 0, %s37
    %s41 = sphi 0, %s40
    %s57 = sphi 0, %s41
    %s61 = sphi 0, %s61
    %s63 = sphi 0, %s61
    %s64 = sphi 0, %s63
    %s78 = sphi 0, %s64
    %s82 = sphi 0, %s82
    %s84 = sphi 0, %s82
    %s85 = sphi 0, %s84
    %s99 = sphi 0, %s85
    %s103 = sphi 0, %s103
    %s105 = sphi 0, %s103
    %s106 = sphi 0, %s105
    %s120 = sphi 0, %s106
    %s128 = sphi 0, %s130
    %s131 = sphi 0, %s128
    %s132 = sphi 0, %s131
    %s148 = sphi 0, %s132
    %s156 = sphi 0, %s158
    %s159 = sphi 0, %s156
    %s160 = sphi 0, %s159
    %s176 = sphi 0, %s160
    %s184 = sphi 0, %s186
    %s187 = sphi 0, %s184
    %s188 = sphi 0, %s187
    %s204 = sphi 0, %s188
  $region4: #{_lambda_.1} parent=0 // loop_header_branch
    %16 = sbr.rel (%p14) target = $region8
  $region5: #{_lambda_.1} parent=0 // loop_body
    %s18 = ssub.s32 %s13, 1
    %s19 = ssub.s32 %s13, 2
    %s26 = sadd.s32 1, %s21
    %p27 = scmp.ge.s32.totalorder %s26, 1
    %s28 = scalar_select %p27, 0, %s26
    %s29 = sadd.s32 1, %s20
    %s30 = scalar_select %p27, %s29, %s20
    %p31 = scmp.ge.s32.totalorder %s30, 2
    %s32 = scalar_select %p31, 0, %s30
    %s33 = ssub.s32 %s20, %s32
    %s34 = ssub.s32 %s21, %s28
    %s35 = sor.u32 %s33, %s34
    %p36 = scmp.eq.s32.totalorder %s35, 0
    %s38 = sadd.s32 %s37, 1
    %s39 = scalar_select %p36, %s37, %s38
    %p42 = pneg %p36
    %p43 = scmp.eq.s32.totalorder %s13, 1
    %p44 = por %p42, %p43
    %p45 = scmp.ne.s32.totalorder %s37, %s40
    %p46 = scmp.eq.s32.totalorder %s13, 0
    %p47 = por %p45, %p46
    %p48 = scmp.ne.s32.totalorder %s37, %s40
    %p49 = scmp.eq.s32.totalorder %s18, 1
    %p50 = por %p48, %p49
    %p51 = scmp.ne.s32.totalorder %s40, %s41
    %p52 = scmp.eq.s32.totalorder %s18, 0
    %p53 = por %p51, %p52
    %p54 = scmp.ne.s32.totalorder %s40, %s41
    %p55 = scmp.eq.s32.totalorder %s19, 1
    %p56 = por %p54, %p55
    %p58 = scmp.ne.s32.totalorder %s41, %s57
    %p59 = scmp.eq.s32.totalorder %s19, 0
    %p60 = por %p58, %p59
    %s62 = sadd.s32 %s61, 1
    %p65 = scmp.eq.s32.totalorder %s13, 1
    %p66 = scmp.ne.s32.totalorder %s61, %s63
    %p67 = scmp.eq.s32.totalorder %s13, 0
    %p68 = por %p66, %p67
    %p69 = scmp.ne.s32.totalorder %s61, %s63
    %p70 = scmp.eq.s32.totalorder %s18, 1
    %p71 = por %p69, %p70
    %p72 = scmp.ne.s32.totalorder %s63, %s64
    %p73 = scmp.eq.s32.totalorder %s18, 0
    %p74 = por %p72, %p73
    %p75 = scmp.ne.s32.totalorder %s63, %s64
    %p76 = scmp.eq.s32.totalorder %s19, 1
    %p77 = por %p75, %p76
    %p79 = scmp.ne.s32.totalorder %s64, %s78
    %p80 = scmp.eq.s32.totalorder %s19, 0
    %p81 = por %p79, %p80
    %s83 = sadd.s32 %s82, 1
    %p86 = scmp.eq.s32.totalorder %s13, 1
    %p87 = scmp.ne.s32.totalorder %s82, %s84
    %p88 = scmp.eq.s32.totalorder %s13, 0
    %p89 = por %p87, %p88
    %p90 = scmp.ne.s32.totalorder %s82, %s84
    %p91 = scmp.eq.s32.totalorder %s18, 1
    %p92 = por %p90, %p91
    %p93 = scmp.ne.s32.totalorder %s84, %s85
    %p94 = scmp.eq.s32.totalorder %s18, 0
    %p95 = por %p93, %p94
    %p96 = scmp.ne.s32.totalorder %s84, %s85
    %p97 = scmp.eq.s32.totalorder %s19, 1
    %p98 = por %p96, %p97
    %p100 = scmp.ne.s32.totalorder %s85, %s99
    %p101 = scmp.eq.s32.totalorder %s19, 0
    %p102 = por %p100, %p101
    %s104 = sadd.s32 %s103, 1
    %p107 = scmp.eq.s32.totalorder %s13, 1
    %p108 = scmp.ne.s32.totalorder %s103, %s105
    %p109 = scmp.eq.s32.totalorder %s13, 0
    %p110 = por %p108, %p109
    %p111 = scmp.ne.s32.totalorder %s103, %s105
    %p112 = scmp.eq.s32.totalorder %s18, 1
    %p113 = por %p111, %p112
    %p114 = scmp.ne.s32.totalorder %s105, %s106
    %p115 = scmp.eq.s32.totalorder %s18, 0
    %p116 = por %p114, %p115
    %p117 = scmp.ne.s32.totalorder %s105, %s106
    %p118 = scmp.eq.s32.totalorder %s19, 1
    %p119 = por %p117, %p118
    %p121 = scmp.ne.s32.totalorder %s106, %s120
    %p122 = scmp.eq.s32.totalorder %s19, 0
    %p123 = por %p121, %p122
    %s124 = ssub.s32 %s20, %s32
    %s125 = ssub.s32 %s21, %s28
    %s126 = sor.u32 %s124, %s125
    %p127 = scmp.eq.s32.totalorder %s126, 0
    %s129 = sadd.s32 %s128, 1
    %s130 = scalar_select %p127, %s128, %s129
    %p133 = pneg %p127
    %p134 = scmp.eq.s32.totalorder %s13, 1
    %p135 = por %p133, %p134
    %p136 = scmp.ne.s32.totalorder %s128, %s131
    %p137 = scmp.eq.s32.totalorder %s13, 0
    %p138 = por %p136, %p137
    %p139 = scmp.ne.s32.totalorder %s128, %s131
    %p140 = scmp.eq.s32.totalorder %s18, 1
    %p141 = por %p139, %p140
    %p142 = scmp.ne.s32.totalorder %s131, %s132
    %p143 = scmp.eq.s32.totalorder %s18, 0
    %p144 = por %p142, %p143
    %p145 = scmp.ne.s32.totalorder %s131, %s132
    %p146 = scmp.eq.s32.totalorder %s19, 1
    %p147 = por %p145, %p146
    %p149 = scmp.ne.s32.totalorder %s132, %s148
    %p150 = scmp.eq.s32.totalorder %s19, 0
    %p151 = por %p149, %p150
    %s152 = ssub.s32 %s20, %s32
    %s153 = ssub.s32 %s21, %s28
    %s154 = sor.u32 %s152, %s153
    %p155 = scmp.eq.s32.totalorder %s154, 0
    %s157 = sadd.s32 %s156, 1
    %s158 = scalar_select %p155, %s156, %s157
    %p161 = pneg %p155
    %p162 = scmp.eq.s32.totalorder %s13, 1
    %p163 = por %p161, %p162
    %p164 = scmp.ne.s32.totalorder %s156, %s159
    %p165 = scmp.eq.s32.totalorder %s13, 0
    %p166 = por %p164, %p165
    %p167 = scmp.ne.s32.totalorder %s156, %s159
    %p168 = scmp.eq.s32.totalorder %s18, 1
    %p169 = por %p167, %p168
    %p170 = scmp.ne.s32.totalorder %s159, %s160
    %p171 = scmp.eq.s32.totalorder %s18, 0
    %p172 = por %p170, %p171
    %p173 = scmp.ne.s32.totalorder %s159, %s160
    %p174 = scmp.eq.s32.totalorder %s19, 1
    %p175 = por %p173, %p174
    %p177 = scmp.ne.s32.totalorder %s160, %s176
    %p178 = scmp.eq.s32.totalorder %s19, 0
    %p179 = por %p177, %p178
    %s180 = ssub.s32 %s20, %s32
    %s181 = ssub.s32 %s21, %s28
    %s182 = sor.u32 %s180, %s181
    %p183 = scmp.eq.s32.totalorder %s182, 0
    %s185 = sadd.s32 %s184, 1
    %s186 = scalar_select %p183, %s184, %s185
    %p189 = pneg %p183
    %p190 = scmp.eq.s32.totalorder %s13, 1
    %p191 = por %p189, %p190
    %p192 = scmp.ne.s32.totalorder %s184, %s187
    %p193 = scmp.eq.s32.totalorder %s13, 0
    %p194 = por %p192, %p193
    %p195 = scmp.ne.s32.totalorder %s184, %s187
    %p196 = scmp.eq.s32.totalorder %s18, 1
    %p197 = por %p195, %p196
    %p198 = scmp.ne.s32.totalorder %s187, %s188
    %p199 = scmp.eq.s32.totalorder %s18, 0
    %p200 = por %p198, %p199
    %p201 = scmp.ne.s32.totalorder %s187, %s188
    %p202 = scmp.eq.s32.totalorder %s19, 1
    %p203 = por %p201, %p202
    %p205 = scmp.ne.s32.totalorder %s188, %s204
    %p206 = scmp.eq.s32.totalorder %s19, 0
    %p207 = por %p205, %p206
    %p208 = scmp.le.s32.totalorder 1, %s13
    %p209 = scmp.lt.s32.totalorder %s13, 3
    %p210 = pnand %p208, %p209
    %p211 = pneg %p210
    // Predicated region
    $region9: #{_lambda_.1} parent=5 // pred_check
      _
    $region10: #{_lambda_.1} parent=5 // pred_check_branch
      %213 = sbr.rel (%p210) target = $region12
    $region11: #{_lambda_.1} parent=5 // pred_region
      %s214 = ssub.s32 %s13, 1
      // Predicated region
      $region13: #{_lambda_.1} parent=11 // pred_check
        %p215 = pneg %p74
      $region14: #{_lambda_.1} parent=11 // pred_check_branch
        %217 = sbr.rel (%p215) target = $region16
      $region15: #{_lambda_.1} parent=11 // pred_region
        _
      $region16: #{_lambda_.1} parent=11 // pred_fallthru
        _
      // Predicated region
      $region17: #{_lambda_.1} parent=11 // pred_check
        %p218 = pneg %p95
      $region18: #{_lambda_.1} parent=11 // pred_check_branch
        %220 = sbr.rel (%p218) target = $region20
      $region19: #{_lambda_.1} parent=11 // pred_region
        _
      $region20: #{_lambda_.1} parent=11 // pred_fallthru
        _
      // Predicated region
      $region21: #{_lambda_.1} parent=11 // pred_check
        %p221 = pneg %p116
      $region22: #{_lambda_.1} parent=11 // pred_check_branch
        %223 = sbr.rel (%p221) target = $region24
      $region23: #{_lambda_.1} parent=11 // pred_region
        _
      $region24: #{_lambda_.1} parent=11 // pred_fallthru
        _
    $region12: #{_lambda_.1} parent=5 // pred_fallthru
      _
    %p224 = scmp.lt.s32.totalorder %s13, 2
    // Predicated region
    $region25: #{_lambda_.1} parent=5 // pred_check
      %p225 = pneg %p224
    $region26: #{_lambda_.1} parent=5 // pred_check_branch
      %227 = sbr.rel (%p225) target = $region28
    $region27: #{_lambda_.1} parent=5 // pred_region
      // Predicated region
      $region29: #{_lambda_.1} parent=27 // pred_check
        %p228 = pneg %p47
      $region30: #{_lambda_.1} parent=27 // pred_check_branch
        %230 = sbr.rel (%p228) target = $region32
      $region31: #{_lambda_.1} parent=27 // pred_region
        %s231 = smul.u32 2, %s21
        %p232 = scmp.lt.s32.totalorder %s20, 1
        %s233 = scalar_select %p232, %s20, 1
        %p234 = scmp.lt.s32.totalorder %s231, 1
        %s235 = scalar_select %p234, %s231, 1
        %s236 = smul.addr %s233, 2
        %s237 = sadd.s32 %s235, %s236
        %s238 = smul.addr %s237, 8
        %s239 = scalar_lea.vmem %s0, %s238
        %s240 = smul.u32 2, %s21
      $region32: #{_lambda_.1} parent=27 // pred_fallthru
        _
    $region28: #{_lambda_.1} parent=5 // pred_fallthru
      _
    %p241 = scmp.le.s32.totalorder 1, %s13
    %p242 = scmp.lt.s32.totalorder %s13, 3
    %p243 = pnand %p241, %p242
    %p244 = pneg %p243
    // Predicated region
    $region33: #{_lambda_.1} parent=5 // pred_check
      _
    $region34: #{_lambda_.1} parent=5 // pred_check_branch
      %246 = sbr.rel (%p243) target = $region36
    $region35: #{_lambda_.1} parent=5 // pred_region
      %s247 = ssub.s32 %s13, 1
      %s248 = smul.u32 2, %s23
      %p249 = scmp.lt.s32.totalorder %s22, 1
      %s250 = scalar_select %p249, %s22, 1
      %p251 = scmp.lt.s32.totalorder %s248, 1
      %s252 = scalar_select %p251, %s248, 1
      %s253 = smul.addr %s250, 2
      %s254 = sadd.s32 %s252, %s253
      %s255 = smul.addr %s254, 8
      %s256 = scalar_lea.vmem %s0, %s255
      %p257 = pneg %p53
      %p258 = pneg %p50
      %p259 = pneg %p74
      %p260 = pneg %p71
      %p261 = pneg %p95
      %p262 = pneg %p92
      %p263 = pneg %p116
      %p264 = pneg %p113
      %p265 = pneg %p144
      %p266 = pneg %p141
      %s267 = smul.u32 2, %s23
      %p268 = scmp.lt.s32.totalorder %s22, 1
      %s269 = scalar_select %p268, %s22, 1
      %p270 = scmp.lt.s32.totalorder %s267, 1
      %s271 = scalar_select %p270, %s267, 1
      %s272 = smul.addr %s269, 2
      %s273 = sadd.s32 %s271, %s272
      %s274 = smul.addr %s273, 8
      %s275 = scalar_lea.vmem %s4, %s274
      %p276 = pneg %p172
      %p277 = pneg %p169
      %s278 = smul.u32 2, %s23
      %p279 = scmp.lt.s32.totalorder %s22, 1
      %s280 = scalar_select %p279, %s22, 1
      %p281 = scmp.lt.s32.totalorder %s278, 1
      %s282 = scalar_select %p281, %s278, 1
      %s283 = smul.addr %s280, 2
      %s284 = sadd.s32 %s282, %s283
      %s285 = scalar_lea.vmem %s5, %s284
      %p286 = pneg %p200
      %p287 = pneg %p197
      %p288 = scmp.lt.s32.totalorder %s22, 1
      %s289 = scalar_select %p288, %s22, 1
      %p290 = scmp.lt.s32.totalorder %s23, 0
      %s291 = scalar_select %p290, %s23, 0
      %s292 = sadd.s32 %s291, %s289
      %s293 = scalar_lea.vmem %s6, %s292
      %s294 = smul.u32 2, %s23
      %p295 = scmp.lt.s32.totalorder %s22, 1
      %s296 = scalar_select %p295, %s22, 1
      %p297 = scmp.lt.s32.totalorder %s294, 1
      %s298 = scalar_select %p297, %s294, 1
      %s299 = smul.addr %s296, 2
      %s300 = sadd.s32 %s298, %s299
      %s301 = smul.addr %s300, 8
      %s302 = scalar_lea.vmem %s0, %s301
      %s303 = smul.u32 2, %s23
      %s304 = smul.u32 2, %s23
      %p305 = scmp.lt.s32.totalorder %s22, 1
      %s306 = scalar_select %p305, %s22, 1
      %p307 = scmp.lt.s32.totalorder %s304, 1
      %s308 = scalar_select %p307, %s304, 1
      %s309 = smul.addr %s306, 2
      %s310 = sadd.s32 %s308, %s309
      %s311 = smul.addr %s310, 8
      %s312 = scalar_lea.vmem %s4, %s311
      %s313 = smul.u32 2, %s23
      %s314 = smul.u32 2, %s23
      %p315 = scmp.lt.s32.totalorder %s22, 1
      %s316 = scalar_select %p315, %s22, 1
      %p317 = scmp.lt.s32.totalorder %s314, 1
      %s318 = scalar_select %p317, %s314, 1
      %s319 = smul.addr %s316, 2
      %s320 = sadd.s32 %s318, %s319
      %s321 = scalar_lea.vmem %s5, %s320
      %s322 = smul.u32 2, %s23
      %p323 = scmp.lt.s32.totalorder %s22, 1
      %s324 = scalar_select %p323, %s22, 1
      %p325 = scmp.lt.s32.totalorder %s23, 0
      %s326 = scalar_select %p325, %s23, 0
      %s327 = sadd.s32 %s326, %s324
      %s328 = scalar_lea.vmem %s6, %s327
      %v329 = vld [vmem:[%s302] sm:$0xff]
      %v330 = vld [vmem:[%s302 + $0x8] sm:$0xff]
      %v331 = vld [vmem:[%s1] sm:$0xff]
      %v332 = vld [vmem:[%s1 + $0x8] sm:$0xff]
      %v333 = vld [vmem:[%s1 + $0x10] sm:$0xff]
      %v334 = vld [vmem:[%s1 + $0x18] sm:$0xff]
      %vm335 = vcmask 64512
      %v337 = vsel %vm335, %v331, 0
      %v340 = vsel %vm335, %v332, 0
      %v343 = vsel %vm335, %v333, 0
      %v346 = vsel %vm335, %v334, 0
      %348 = vmatpush.msra.mxu0 0.0
      %349 = vmatpush.msra.mxu0 0.0
      %350 = vmatpush.msra.mxu0 0.0
      %351 = vmatpush.msra.mxu0 0.0
      %352 = vmatpush.msra.mxu0 0.0
      %353 = vmatpush.msra.mxu0 0.0
      %354 = vmatpush.msra.mxu0 0.0
      %355 = vmatpush.msra.mxu0 0.0
      %356 = vmatpush.msra.mxu0 0.0
      %357 = vmatpush.msra.mxu0 0.0
      %358 = vmatpush.msra.mxu0 0.0
      %359 = vmatpush.msra.mxu0 0.0
      %360 = vmatpush.msra.mxu0 0.0
      %361 = vmatpush.msra.mxu0 0.0
      %362 = vmatpush.msra.mxu0 0.0
      %363 = vmatpush.msra.mxu0 %v329
      %364 = vmatmul.f32.gmra.mxu0 %v337
      %v365 = vpop.f32.mrf.mxu0
      %v366 = vadd.f32 0.0, %v365
      %367 = vmatmul.f32.gmra.mxu0 %v340
      %v368 = vpop.f32.mrf.mxu0
      %v369 = vadd.f32 0.0, %v368
      %370 = vmatmul.f32.gmra.mxu0 %v343
      %v371 = vpop.f32.mrf.mxu0
      %v372 = vadd.f32 0.0, %v371
      %373 = vmatmul.f32.gmra.mxu0 %v346
      %v374 = vpop.f32.mrf.mxu0
      %v375 = vadd.f32 0.0, %v374
      %376 = vdwg.mxu0
      %377 = vmatpush.msra.mxu0 0.0
      %378 = vmatpush.msra.mxu0 0.0
      %379 = vmatpush.msra.mxu0 0.0
      %380 = vmatpush.msra.mxu0 0.0
      %381 = vmatpush.msra.mxu0 0.0
      %382 = vmatpush.msra.mxu0 0.0
      %383 = vmatpush.msra.mxu0 0.0
      %384 = vmatpush.msra.mxu0 0.0
      %385 = vmatpush.msra.mxu0 0.0
      %386 = vmatpush.msra.mxu0 0.0
      %387 = vmatpush.msra.mxu0 0.0
      %388 = vmatpush.msra.mxu0 0.0
      %389 = vmatpush.msra.mxu0 0.0
      %390 = vmatpush.msra.mxu0 0.0
      %391 = vmatpush.msra.mxu0 0.0
      %392 = vmatpush.msra.mxu0 %v330
      %393 = vmatmul.f32.gmra.mxu0 %v337
      %v394 = vpop.f32.mrf.mxu0
      %v395 = vadd.f32 0.0, %v394
      %396 = vmatmul.f32.gmra.mxu0 %v340
      %v397 = vpop.f32.mrf.mxu0
      %v398 = vadd.f32 0.0, %v397
      %399 = vmatmul.f32.gmra.mxu0 %v343
      %v400 = vpop.f32.mrf.mxu0
      %v401 = vadd.f32 0.0, %v400
      %402 = vmatmul.f32.gmra.mxu0 %v346
      %v403 = vpop.f32.mrf.mxu0
      %v404 = vadd.f32 0.0, %v403
      %405 = vdwg.mxu0
      %v406 = vld [vmem:[%s3] sm:$0xff]
      %v407 = vld [vmem:[%s3 + $0x8] sm:$0xff]
      %v408 = vld [vmem:[%s3 + $0x10] sm:$0xff]
      %v409 = vld [vmem:[%s3 + $0x18] sm:$0xff]
      %411 = vset.pattern.permute.xlu0 0
      %412 = vperm.xlu0 %411, %v406
      %v413 = vpop.permute.xlu0 %412
      %416 = vset.pattern.permute.xlu0 0
      %417 = vperm.xlu0 %416, %v407
      %v418 = vpop.permute.xlu0 %417
      %421 = vset.pattern.permute.xlu0 0
      %422 = vperm.xlu0 %421, %v408
      %v423 = vpop.permute.xlu0 %422
      %426 = vset.pattern.permute.xlu0 0
      %427 = vperm.xlu0 %426, %v409
      %v428 = vpop.permute.xlu0 %427
      %v430 = vsub.f32 %v413, %v366
      %v431 = vsub.f32 %v413, %v395
      %v432 = vsub.f32 %v418, %v369
      %v433 = vsub.f32 %v418, %v398
      %v434 = vsub.f32 %v423, %v372
      %v435 = vsub.f32 %v423, %v401
      %v436 = vsub.f32 %v428, %v375
      %v437 = vsub.f32 %v428, %v404
      %v438 = vlaneseq
      %v439 = vshrl.u32 %v438, 7
      %v440 = vadd.s32 %v439, 8
      %v441 = vadd.s32 %v439, 16
      %v442 = vadd.s32 %v439, 24
      %v443 = vmin.f32 %v430, %v434
      %v444 = vmin.f32 %v432, %v436
      %v445 = vmin.f32 %v443, %v444
      %v446 = vrot.slane %v445, 4
      %v447 = vmin.f32 %v445, %v446
      %v448 = vrot.slane %v447, 2
      %v449 = vmin.f32 %v447, %v448
      %v450 = vrot.slane %v449, 1
      %v451 = vmin.f32 %v449, %v450
      %v452 = vmin.f32 %v431, %v435
      %v453 = vmin.f32 %v433, %v437
      %v454 = vmin.f32 %v452, %v453
      %v455 = vrot.slane %v454, 4
      %v456 = vmin.f32 %v454, %v455
      %v457 = vrot.slane %v456, 2
      %v458 = vmin.f32 %v456, %v457
      %v459 = vrot.slane %v458, 1
      %v460 = vmin.f32 %v458, %v459
      %vm461 = vcmp.eq.f32.partialorder %v430, %v451
      %vm462 = vcmp.eq.f32.partialorder %v431, %v460
      %vm463 = vcmp.eq.f32.partialorder %v432, %v451
      %vm464 = vcmp.eq.f32.partialorder %v433, %v460
      %vm465 = vcmp.eq.f32.partialorder %v434, %v451
      %vm466 = vcmp.eq.f32.partialorder %v435, %v460
      %vm467 = vcmp.eq.f32.partialorder %v436, %v451
      %vm468 = vcmp.eq.f32.partialorder %v437, %v460
      %v469 = vsel %vm461, %v439, 32
      %v470 = vsel %vm462, %v439, 32
      %v471 = vsel %vm463, %v440, 32
      %v472 = vsel %vm464, %v440, 32
      %v473 = vsel %vm465, %v441, 32
      %v474 = vsel %vm466, %v441, 32
      %v475 = vsel %vm467, %v442, 32
      %v476 = vsel %vm468, %v442, 32
      %vm477 = vcmp.lt.s32.totalorder %v469, %v473
      %v478 = vsel %vm477, %v469, %v473
      %vm479 = vcmp.lt.s32.totalorder %v471, %v475
      %v480 = vsel %vm479, %v471, %v475
      %vm481 = vcmp.lt.s32.totalorder %v478, %v480
      %v482 = vsel %vm481, %v478, %v480
      %v483 = vrot.slane %v482, 4
      %vm484 = vcmp.lt.s32.totalorder %v482, %v483
      %v485 = vsel %vm484, %v482, %v483
      %v486 = vrot.slane %v485, 2
      %vm487 = vcmp.lt.s32.totalorder %v485, %v486
      %v488 = vsel %vm487, %v485, %v486
      %v489 = vrot.slane %v488, 1
      %vm490 = vcmp.lt.s32.totalorder %v488, %v489
      %v491 = vsel %vm490, %v488, %v489
      %vm492 = vcmp.lt.s32.totalorder %v470, %v474
      %v493 = vsel %vm492, %v470, %v474
      %vm494 = vcmp.lt.s32.totalorder %v472, %v476
      %v495 = vsel %vm494, %v472, %v476
      %vm496 = vcmp.lt.s32.totalorder %v493, %v495
      %v497 = vsel %vm496, %v493, %v495
      %v498 = vrot.slane %v497, 4
      %vm499 = vcmp.lt.s32.totalorder %v497, %v498
      %v500 = vsel %vm499, %v497, %v498
      %v501 = vrot.slane %v500, 2
      %vm502 = vcmp.lt.s32.totalorder %v500, %v501
      %v503 = vsel %vm502, %v500, %v501
      %v504 = vrot.slane %v503, 1
      %vm505 = vcmp.lt.s32.totalorder %v503, %v504
      %v506 = vsel %vm505, %v503, %v504
      %vm507 = vcmp.eq.s32.totalorder %v439, %v491
      %vm508 = vcmp.eq.s32.totalorder %v439, %v506
      %vm509 = vcmp.eq.s32.totalorder %v440, %v491
      %vm510 = vcmp.eq.s32.totalorder %v440, %v506
      %vm511 = vcmp.eq.s32.totalorder %v441, %v491
      %vm512 = vcmp.eq.s32.totalorder %v441, %v506
      %vm513 = vcmp.eq.s32.totalorder %v442, %v491
      %vm514 = vcmp.eq.s32.totalorder %v442, %v506
      %v515 = vsel %vm507, 1, 0
      %v516 = vsel %vm508, 1, 0
      %v517 = vsel %vm509, 1, 0
      %v518 = vsel %vm510, 1, 0
      %v519 = vsel %vm511, 1, 0
      %v520 = vsel %vm512, 1, 0
      %v521 = vsel %vm513, 1, 0
      %v522 = vsel %vm514, 1, 0
      %v523 = vcvt.s32.f32 %v515
      %v524 = vcvt.s32.f32 %v516
      %v525 = vcvt.s32.f32 %v517
      %v526 = vcvt.s32.f32 %v518
      %v527 = vcvt.s32.f32 %v519
      %v528 = vcvt.s32.f32 %v520
      %v529 = vcvt.s32.f32 %v521
      %v530 = vcvt.s32.f32 %v522
      %v531 = vld [vmem:[%s2] sm:$0xff]
      %vm532 = vcmask 261120
      %v534 = vsel %vm532, %v531, 0
      %536 = vmatpush.msra.mxu0 0.0
      %537 = vmatpush.msra.mxu0 0.0
      %538 = vmatpush.msra.mxu0 0.0
      %539 = vmatpush.msra.mxu0 0.0
      %540 = vmatpush.msra.mxu0 0.0
      %541 = vmatpush.msra.mxu0 0.0
      %542 = vmatpush.msra.mxu0 0.0
      %543 = vmatpush.msra.mxu0 0.0
      %544 = vmatpush.msra.mxu0 0.0
      %545 = vmatpush.msra.mxu0 0.0
      %546 = vmatpush.msra.mxu0 0.0
      %547 = vmatpush.msra.mxu0 0.0
      %548 = vmatpush.msra.mxu0 %v529
      %549 = vmatpush.msra.mxu0 %v527
      %550 = vmatpush.msra.mxu0 %v525
      %551 = vmatpush.msra.mxu0 %v523
      %552 = vmatmul.f32.gmra.mxu0 %v534
      %v553 = vpop.f32.mrf.mxu0
      %v554 = vadd.f32 0.0, %v553
      %555 = vdwg.mxu0
      %556 = vmatpush.msra.mxu0 0.0
      %557 = vmatpush.msra.mxu0 0.0
      %558 = vmatpush.msra.mxu0 0.0
      %559 = vmatpush.msra.mxu0 0.0
      %560 = vmatpush.msra.mxu0 0.0
      %561 = vmatpush.msra.mxu0 0.0
      %562 = vmatpush.msra.mxu0 0.0
      %563 = vmatpush.msra.mxu0 0.0
      %564 = vmatpush.msra.mxu0 0.0
      %565 = vmatpush.msra.mxu0 0.0
      %566 = vmatpush.msra.mxu0 0.0
      %567 = vmatpush.msra.mxu0 0.0
      %568 = vmatpush.msra.mxu0 %v530
      %569 = vmatpush.msra.mxu0 %v528
      %570 = vmatpush.msra.mxu0 %v526
      %571 = vmatpush.msra.mxu0 %v524
      %572 = vmatmul.f32.gmra.mxu0 %v534
      %v573 = vpop.f32.mrf.mxu0
      %v574 = vadd.f32 0.0, %v573
      %575 = vdwg.mxu0
      %576 = vst [vmem:[%s312] sm:$0xff] %v554
      %577 = vst [vmem:[%s312 + $0x8] sm:$0xff] %v574
      %v578 = vrot.slane %v506, 7
      %vm579 = vcmask 1040384
      %v580 = vsel %vm579, %v491, %v578
      %v581 = vlaneseq
      %vm582 = vcmp.ge.s32.totalorder %v581, 0
      %vm583 = vcmp.lt.s32.totalorder %v581, 256
      %vm584 = vmand %vm582, %vm583
      %585 = vst.msk [vmem:[%s321] sm:$0x3] %vm584, %v580
      %v586 = vsub.f32 %v554, %v329
      %v587 = vsub.f32 %v574, %v330
      %v588 = vmul.f32 %v586, %v586
      %v589 = vmul.f32 %v587, %v587
      %v590 = vadd.f32 %v588, %v589
      %591 = vadd.xlane.f32.xlu0 %v590
      %v592 = vpop.xlane.xlu0 %591
      %v593 = vrot.slane %v592, 4
      %v594 = vadd.f32 %v592, %v593
      %v595 = vrot.slane %v594, 2
      %v596 = vadd.f32 %v594, %v595
      %v597 = vrot.slane %v596, 1
      %v598 = vadd.f32 %v596, %v597
      %s599 = vtos %v598
      %v600 = vstv %s599
      %vm601 = vcmask 0
      %602 = vst.msk [vmem:[%s328] sm:$0x1] %vm601, %v600
      %s603 = smul.u32 2, %s23
      %p604 = scmp.lt.s32.totalorder %s22, 1
      %s605 = scalar_select %p604, %s22, 1
      %p606 = scmp.lt.s32.totalorder %s603, 1
      %s607 = scalar_select %p606, %s603, 1
      %s608 = smul.addr %s605, 2
      %s609 = sadd.s32 %s607, %s608
      %s610 = smul.addr %s609, 8
      %s611 = scalar_lea.vmem %s4, %s610
      %s612 = smul.u32 2, %s23
      %p613 = scmp.lt.s32.totalorder %s22, 1
      %s614 = scalar_select %p613, %s22, 1
      %p615 = scmp.lt.s32.totalorder %s612, 1
      %s616 = scalar_select %p615, %s612, 1
      %s617 = smul.addr %s614, 2
      %s618 = sadd.s32 %s616, %s617
      %s619 = scalar_lea.vmem %s5, %s618
      %p620 = scmp.lt.s32.totalorder %s22, 1
      %s621 = scalar_select %p620, %s22, 1
      %p622 = scmp.lt.s32.totalorder %s23, 0
      %s623 = scalar_select %p622, %s23, 0
      %s624 = sadd.s32 %s623, %s621
      %s625 = scalar_lea.vmem %s6, %s624
      // Predicated region
      $region37: #{_lambda_.1} parent=35 // pred_check
        %p626 = pneg %p141
      $region38: #{_lambda_.1} parent=35 // pred_check_branch
        %628 = sbr.rel (%p626) target = $region40
      $region39: #{_lambda_.1} parent=35 // pred_region
        %s629 = smul.u32 2, %s23
      $region40: #{_lambda_.1} parent=35 // pred_fallthru
        _
      // Predicated region
      $region41: #{_lambda_.1} parent=35 // pred_check
        %p630 = pneg %p169
      $region42: #{_lambda_.1} parent=35 // pred_check_branch
        %632 = sbr.rel (%p630) target = $region44
      $region43: #{_lambda_.1} parent=35 // pred_region
        %s633 = smul.u32 2, %s23
      $region44: #{_lambda_.1} parent=35 // pred_fallthru
        _
      // Predicated region
      $region45: #{_lambda_.1} parent=35 // pred_check
        %p634 = pneg %p197
      $region46: #{_lambda_.1} parent=35 // pred_check_branch
        %636 = sbr.rel (%p634) target = $region48
      $region47: #{_lambda_.1} parent=35 // pred_region
        _
      $region48: #{_lambda_.1} parent=35 // pred_fallthru
        _
    $region36: #{_lambda_.1} parent=5 // pred_fallthru
      _
    %p637 = scmp.le.s32.totalorder 2, %s13
    // Predicated region
    $region49: #{_lambda_.1} parent=5 // pred_check
      %p638 = pneg %p637
    $region50: #{_lambda_.1} parent=5 // pred_check_branch
      %640 = sbr.rel (%p638) target = $region52
    $region51: #{_lambda_.1} parent=5 // pred_region
      %s641 = ssub.s32 %s13, 2
      // Predicated region
      $region53: #{_lambda_.1} parent=51 // pred_check
        %p642 = pneg %p147
      $region54: #{_lambda_.1} parent=51 // pred_check_branch
        %644 = sbr.rel (%p642) target = $region56
      $region55: #{_lambda_.1} parent=51 // pred_region
        %s645 = smul.u32 2, %s25
        %p646 = scmp.lt.s32.totalorder %s24, 1
        %s647 = scalar_select %p646, %s24, 1
        %p648 = scmp.lt.s32.totalorder %s645, 1
        %s649 = scalar_select %p648, %s645, 1
        %s650 = smul.addr %s647, 2
        %s651 = sadd.s32 %s649, %s650
        %s652 = smul.addr %s651, 8
        %s653 = scalar_lea.vmem %s4, %s652
      $region56: #{_lambda_.1} parent=51 // pred_fallthru
        _
      // Predicated region
      $region57: #{_lambda_.1} parent=51 // pred_check
        %p654 = pneg %p175
      $region58: #{_lambda_.1} parent=51 // pred_check_branch
        %656 = sbr.rel (%p654) target = $region60
      $region59: #{_lambda_.1} parent=51 // pred_region
        %s657 = smul.u32 2, %s25
        %p658 = scmp.lt.s32.totalorder %s24, 1
        %s659 = scalar_select %p658, %s24, 1
        %p660 = scmp.lt.s32.totalorder %s657, 1
        %s661 = scalar_select %p660, %s657, 1
        %s662 = smul.addr %s659, 2
        %s663 = sadd.s32 %s661, %s662
        %s664 = scalar_lea.vmem %s5, %s663
      $region60: #{_lambda_.1} parent=51 // pred_fallthru
        _
      // Predicated region
      $region61: #{_lambda_.1} parent=51 // pred_check
        %p665 = pneg %p203
      $region62: #{_lambda_.1} parent=51 // pred_check_branch
        %667 = sbr.rel (%p665) target = $region64
      $region63: #{_lambda_.1} parent=51 // pred_region
        %p668 = scmp.lt.s32.totalorder %s24, 1
        %s669 = scalar_select %p668, %s24, 1
        %p670 = scmp.lt.s32.totalorder %s25, 0
        %s671 = scalar_select %p670, %s25, 0
        %s672 = sadd.s32 %s671, %s669
        %s673 = scalar_lea.vmem %s6, %s672
      $region64: #{_lambda_.1} parent=51 // pred_fallthru
        _
    $region52: #{_lambda_.1} parent=5 // pred_fallthru
      _
  $region6: #{_lambda_.1} parent=0 // loop_footer
    %s17 = sadd.s32 1, %s13
  $region7: #{_lambda_.1} parent=0 // loop_footer_branch
    %12 = sbr.rel target = $region3
  $region8: #{_lambda_.1} parent=0 // loop_exit
    _

</llo_original>
